<compile_context>
chip_gen: v5e
topology: v5e:2x2
jax: 0.10.0
libtpu: 0.0.40
codegen_flags: <defaults>
</compile_context>

<pallas_src>
import functools

import jax
import jax.numpy as jnp
from jax.experimental import pallas as pl
from jax.experimental.pallas import tpu as pltpu

_LANE = 128
_ROW_TILE = 256                     # row-tile / padding granularity for big graphs
_SLAB_MAX_NPAD = 16384              # (256, n_pad) bf16 x 2 bufs <= 16 MiB
_VMEM_LIMIT = 48 * 1024 * 1024      # fits v7x (64 MiB phys) and v5e/v6e (128 MiB)


def _round_up(x, m):
    return (x + m - 1) // m * m


def _choose_k_tile(n_pad, cap=2048):
    """Largest power-of-two multiple of 256 (<= cap) that divides n_pad."""
    tk = 256
    while tk * 2 <= cap and n_pad % (tk * 2) == 0:
        tk *= 2
    return tk


# ---------------- small-graph fully fused 2-layer GCN (single kernel) ----------------
def _fused_gcn2_kernel(a_ref, x_ref, w1_ref, b1_ref, w2_ref, b2_ref, o_ref):
    # layer 1: relu(A_hat @ (X @ W1) + b1)
    xw1 = jnp.dot(x_ref[...], w1_ref[...], preferred_element_type=jnp.float32)
    h = jnp.dot(a_ref[...], xw1.astype(jnp.bfloat16),
                preferred_element_type=jnp.float32) + b1_ref[...]
    h = jnp.maximum(h, 0.0).astype(jnp.bfloat16)
    # layer 2: A_hat @ (h @ W2) + b2
    xw2 = jnp.dot(h, w2_ref[...], preferred_element_type=jnp.float32)
    o_ref[...] = (jnp.dot(a_ref[...], xw2.astype(jnp.bfloat16),
                          preferred_element_type=jnp.float32) + b2_ref[...])


def fused_gcn2(a_pad, x_pad, w1, b1, w2, b2):
    n_pad = a_pad.shape[0]
    f_in = x_pad.shape[1]
    h_p = w1.shape[1]
    out_p = w2.shape[1]
    return pl.pallas_call(
        _fused_gcn2_kernel,
        out_shape=jax.ShapeDtypeStruct((n_pad, out_p), jnp.float32),
        grid=(1,),
        in_specs=[
            pl.BlockSpec((n_pad, n_pad), lambda i: (0, 0)),   # A_hat (bf16)
            pl.BlockSpec((n_pad, f_in), lambda i: (0, 0)),    # X     (bf16)
            pl.BlockSpec((f_in, h_p), lambda i: (0, 0)),      # W1    (bf16)
            pl.BlockSpec((1, h_p), lambda i: (0, 0)),         # b1    (f32)
            pl.BlockSpec((h_p, out_p), lambda i: (0, 0)),     # W2    (bf16)
            pl.BlockSpec((1, out_p), lambda i: (0, 0)),       # b2    (f32)
        ],
        out_specs=pl.BlockSpec((n_pad, out_p), lambda i: (0, 0)),
        compiler_params=pltpu.CompilerParams(
            dimension_semantics=("arbitrary",),
            vmem_limit_bytes=_VMEM_LIMIT,
        ),
    )(a_pad, x_pad, w1, b1, w2, b2)


# ------------------------- projection kernel: XW = X @ W -----------------------------
def _proj_kernel(x_ref, w_ref, o_ref):
    o_ref[...] = jnp.dot(
        x_ref[...], w_ref[...], preferred_element_type=jnp.float32
    ).astype(o_ref.dtype)


def project_pallas(x, w, *, tm):
    n_pad, f_in = x.shape
    f_out = w.shape[1]
    return pl.pallas_call(
        _proj_kernel,
        out_shape=jax.ShapeDtypeStruct((n_pad, f_out), jnp.bfloat16),
        grid=(n_pad // tm,),
        in_specs=[
            pl.BlockSpec((tm, f_in), lambda i: (i, 0)),       # X row tile
            pl.BlockSpec((f_in, f_out), lambda i: (0, 0)),    # W resident (tiny)
        ],
        out_specs=pl.BlockSpec((tm, f_out), lambda i: (i, 0)),
        compiler_params=pltpu.CompilerParams(
            dimension_semantics=("parallel",),
            vmem_limit_bytes=_VMEM_LIMIT,
        ),
    )(x, w)


def project(h, w_pad, *, tm):
    f_in = h.shape[1]
    if f_in >= _LANE and f_in % _LANE == 0:
        return project_pallas(h, w_pad, tm=tm)
    # Tiny / unaligned contraction dim (e.g. first-layer f_in=8): plain XLA,
    # avoids padding the contraction dim 16x (perf review) and a kernel launch.
    return jnp.dot(h, w_pad, preferred_element_type=jnp.float32).astype(jnp.bfloat16)


# ------------------- aggregation: out = act(A_hat @ XW + b) --------------------------
def _agg_slab_kernel(a_ref, xw_ref, b_ref, o_ref, *, apply_relu):
    # Single matmul per row tile: A_hat row slab (tm, n_pad) x resident XW.
    h = jnp.dot(a_ref[...], xw_ref[...], preferred_element_type=jnp.float32)
    h = h + b_ref[...]
    if apply_relu:
        h = jnp.maximum(h, 0.0)
    o_ref[...] = h.astype(o_ref.dtype)


def _agg_ktiled_kernel(a_ref, xw_ref, b_ref, o_ref, acc_ref, *, tk, apply_relu):
    k = pl.program_id(1)

    @pl.when(k == 0)
    def _():
        acc_ref[...] = jnp.zeros_like(acc_ref)

    off = pl.multiple_of(k * tk, tk)
    acc_ref[...] += jnp.dot(
        a_ref[...], xw_ref[pl.ds(off, tk), :], preferred_element_type=jnp.float32
    )

    @pl.when(k == pl.num_programs(1) - 1)
    def _():
        h = acc_ref[...] + b_ref[...]
        if apply_relu:
            h = jnp.maximum(h, 0.0)
        o_ref[...] = h.astype(o_ref.dtype)


def aggregate(a_pad, xw, b, *, tm, apply_relu, out_dtype):
    n_pad = a_pad.shape[0]
    f_out = xw.shape[1]

    if n_pad <= _SLAB_MAX_NPAD:
        # Row-slab variant: no reduction grid axis, no f32 scratch, XW resident.
        return pl.pallas_call(
            functools.partial(_agg_slab_kernel, apply_relu=apply_relu),
            out_shape=jax.ShapeDtypeStruct((n_pad, f_out), out_dtype),
            grid=(n_pad // tm,),
            in_specs=[
                pl.BlockSpec((tm, n_pad), lambda i: (i, 0)),      # A_hat row slab
                pl.BlockSpec((n_pad, f_out), lambda i: (0, 0)),   # XW resident
                pl.BlockSpec((1, f_out), lambda i: (0, 0)),       # bias resident
            ],
            out_specs=pl.BlockSpec((tm, f_out), lambda i: (i, 0)),
            compiler_params=pltpu.CompilerParams(
                dimension_semantics=("parallel",),
                vmem_limit_bytes=_VMEM_LIMIT,
            ),
        )(a_pad, xw, b)

    # Very large graphs: k-tile the reduction, keep XW resident and slice it in-kernel.
    tk = _choose_k_tile(n_pad)
    return pl.pallas_call(
        functools.partial(_agg_ktiled_kernel, tk=tk, apply_relu=apply_relu),
        out_shape=jax.ShapeDtypeStruct((n_pad, f_out), out_dtype),
        grid=(n_pad // tm, n_pad // tk),          # reduction axis last
        in_specs=[
            pl.BlockSpec((tm, tk), lambda i, k: (i, k)),          # A_hat tile
            pl.BlockSpec((n_pad, f_out), lambda i, k: (0, 0)),    # XW resident
            pl.BlockSpec((1, f_out), lambda i, k: (0, 0)),        # bias
        ],
        out_specs=pl.BlockSpec((tm, f_out), lambda i, k: (i, 0)),
        scratch_shapes=[pltpu.VMEM((tm, f_out), jnp.float32)],
        compiler_params=pltpu.CompilerParams(
            dimension_semantics=("parallel", "arbitrary"),
            vmem_limit_bytes=_VMEM_LIMIT,
        ),
    )(a_pad, xw, b)


# --------------------------------- JAX glue ------------------------------------------
def build_norm_adj_padded(edge_index, num_nodes, n_pad):
    """D^{-1/2} (A + I) D^{-1/2}, built directly as a padded bf16 (n_pad, n_pad) array."""
    src, dst = edge_index[0], edge_index[1]
    loops = jnp.arange(num_nodes, dtype=edge_index.dtype)
    src_all = jnp.concatenate([src, loops])
    dst_all = jnp.concatenate([dst, loops])
    deg = jnp.zeros((num_nodes,), jnp.float32).at[dst_all].add(1.0)
    dinv = jnp.where(deg > 0, 1.0 / jnp.sqrt(deg), 0.0)
    vals = (dinv[dst_all] * dinv[src_all]).astype(jnp.bfloat16)
    a = jnp.zeros((n_pad, n_pad), jnp.bfloat16).at[dst_all, src_all].add(vals)
    return a


def init_gcn_params(key, input_dim, hidden_dim, output_dim, num_layer=2):
    dims = [input_dim] + [hidden_dim] * (num_layer - 1) + [output_dim]
    params = []
    for i in range(num_layer):
        key, wk = jax.random.split(key)
        fan_in, fan_out = dims[i], dims[i + 1]
        scale = jnp.sqrt(6.0 / (fan_in + fan_out))  # glorot-uniform (PyG default)
        w = jax.random.uniform(wk, (fan_in, fan_out), jnp.float32, -scale, scale)
        b = jnp.zeros((fan_out,), jnp.float32)
        params.append((w, b))
    return params


def _pad_w(w, in_width):
    f_in, f_out = w.shape
    f_out_p = _round_up(f_out, _LANE)
    wp = jnp.zeros((in_width, f_out_p), jnp.bfloat16).at[:f_in, :f_out].set(
        w.astype(jnp.bfloat16))
    return wp, f_out_p


def _pad_b(b, f_out_p):
    return jnp.zeros((1, f_out_p), jnp.float32).at[0, : b.shape[0]].set(b)


def gcn_forward(params, x, edge_index, ptr, target_node, pooling=False, batch=None):
    """Mirrors GCN.forward with drop_ratio=0 (dropout is identity)."""
    n, input_dim = x.shape
    output_dim = params[-1][0].shape[1]
    num_layers = len(params)

    # Row-tile-granular padding: over-padding is at most one tile (limits n_pad^2 waste).
    if n <= 512:
        n_pad = max(_round_up(n, 128), 128)
        tm = n_pad
    else:
        n_pad = _round_up(n, _ROW_TILE)
        tm = _ROW_TILE

    a_pad = build_norm_adj_padded(edge_index, n, n_pad)

    if num_layers == 2 and n_pad <= 512:
        # Fully fused 2-layer path: one kernel, weights/biases resident in VMEM.
        (w1, b1), (w2, b2) = params
        f_in_p = _round_up(input_dim, _LANE)
        x_pad = jnp.zeros((n_pad, f_in_p), jnp.bfloat16).at[:n, :input_dim].set(
            x.astype(jnp.bfloat16))
        w1p, h_p = _pad_w(w1, f_in_p)
        b1p = _pad_b(b1, h_p)
        w2p, out_p = _pad_w(w2, h_p)
        b2p = _pad_b(b2, out_p)
        h = fused_gcn2(a_pad, x_pad, w1p, b1p, w2p, b2p)
    else:
        # General layered path: projection (Pallas or XLA for tiny f_in) + aggregation.
        h = jnp.zeros((n_pad, input_dim), jnp.bfloat16).at[:n, :].set(
            x.astype(jnp.bfloat16))
        for li, (w, b) in enumerate(params):
            wp, f_out_p = _pad_w(w, h.shape[1])
            bp = _pad_b(b, f_out_p)
            is_last = li == num_layers - 1
            xw = project(h, wp, tm=tm)
            h = aggregate(a_pad, xw, bp, tm=tm,
                          apply_relu=not is_last,
                          out_dtype=jnp.float32 if is_last else jnp.bfloat16)

    node_emb = h[:n, :output_dim]

    if pooling:
        # global_mean_pool (default pool='mean') — segment mean over `batch`
        num_graphs = ptr.shape[0] - 1
        ones = jnp.ones((n,), jnp.float32)
        counts = jax.ops.segment_sum(ones, batch, num_segments=num_graphs)
        sums = jax.ops.segment_sum(node_emb, batch, num_segments=num_graphs)
        return sums / counts[:, None]
    # default path: graph_emb = node_emb[ptr[:-1] + target_node]
    return node_emb[ptr[:-1] + target_node]


# ----------------------------------- main --------------------------------------------
if __name__ == "__main__":
    key = jax.random.PRNGKey(0)

    # Small synthetic graph batch: 2 graphs x 8 nodes = 16 nodes.
    num_nodes = 16
    input_dim, hidden_dim, output_dim = 8, 32, 16

    key, xk = jax.random.split(key)
    x = jax.random.normal(xk, (num_nodes, input_dim), jnp.float32)

    # Bidirectional ring within each graph of 8 nodes.
    src_list, dst_list = [], []
    for g in range(2):
        base = g * 8
        for i in range(8):
            a, b = base + i, base + (i + 1) % 8
            src_list += [a, b]
            dst_list += [b, a]
    edge_index = jnp.array([src_list, dst_list], dtype=jnp.int32)  # [2, E]

    batch = jnp.array([0] * 8 + [1] * 8, dtype=jnp.int32)
    ptr = jnp.array([0, 8, 16], dtype=jnp.int32)
    target_node = jnp.array([0, 0], dtype=jnp.int32)

    params = init_gcn_params(key, input_dim, hidden_dim, output_dim, num_layer=2)

    graph_emb = gcn_forward(params, x, edge_index, ptr, target_node,
                            pooling=False, batch=batch)
    graph_emb = jax.block_until_ready(graph_emb)
    assert graph_emb.shape == (2, output_dim)
    print("KERNEL_OK")
</pallas_src>

<mosaic_0001>
module attributes {stable_mosaic.version = 11 : i64} {
  func.func @_fused_gcn2_kernel(%arg0: i32, %arg1: memref<128x128xbf16, #tpu.memory_space<vmem>>, %arg2: memref<128x128xbf16, #tpu.memory_space<vmem>>, %arg3: memref<128x128xbf16, #tpu.memory_space<vmem>>, %arg4: memref<1x128xf32, #tpu.memory_space<vmem>>, %arg5: memref<128x128xbf16, #tpu.memory_space<vmem>>, %arg6: memref<1x128xf32, #tpu.memory_space<vmem>>, %arg7: memref<128x128xf32, #tpu.memory_space<vmem>>) attributes {dimension_semantics = [#tpu.dimension_semantics<arbitrary>], iteration_bounds = array<i64: 1>, scalar_prefetch = 0 : i64, scratch_operands = 0 : i64, tpu.core_type = #tpu.core_type<tc>, window_params = [{pipeline_mode = #tpu.pipeline_mode<synchronous>, transform_indices = @transform_0, window_bounds = array<i64: 128, 128>}, {pipeline_mode = #tpu.pipeline_mode<synchronous>, transform_indices = @transform_1, window_bounds = array<i64: 128, 128>}, {pipeline_mode = #tpu.pipeline_mode<synchronous>, transform_indices = @transform_2, window_bounds = array<i64: 128, 128>}, {pipeline_mode = #tpu.pipeline_mode<synchronous>, transform_indices = @transform_3, window_bounds = array<i64: 1, 128>}, {pipeline_mode = #tpu.pipeline_mode<synchronous>, transform_indices = @transform_4, window_bounds = array<i64: 128, 128>}, {pipeline_mode = #tpu.pipeline_mode<synchronous>, transform_indices = @transform_5, window_bounds = array<i64: 1, 128>}, {pipeline_mode = #tpu.pipeline_mode<synchronous>, transform_indices = @transform_6, window_bounds = array<i64: 128, 128>}]} {
    %c0 = arith.constant 0 : index
    %c0_0 = arith.constant 0 : index
    %0 = vector.load %arg2[%c0, %c0_0] : memref<128x128xbf16, #tpu.memory_space<vmem>>, vector<128x128xbf16>
    %c0_1 = arith.constant 0 : index
    %c0_2 = arith.constant 0 : index
    %1 = vector.load %arg3[%c0_1, %c0_2] : memref<128x128xbf16, #tpu.memory_space<vmem>>, vector<128x128xbf16>
    %cst = arith.constant dense<0.000000e+00> : vector<128x128xf32>
    %2 = tpu.matmul %0, %1, %cst {dimension_numbers = #tpu.dot_dimension_numbers<[1], [0], [0], [1], [0, 0, 1, 1], [], []>} : vector<128x128xbf16>, vector<128x128xbf16>, vector<128x128xf32> -> vector<128x128xf32>
    %c0_3 = arith.constant 0 : index
    %c0_4 = arith.constant 0 : index
    %3 = vector.load %arg1[%c0_3, %c0_4] : memref<128x128xbf16, #tpu.memory_space<vmem>>, vector<128x128xbf16>
    %4 = arith.truncf %2 : vector<128x128xf32> to vector<128x128xbf16>
    %cst_5 = arith.constant dense<0.000000e+00> : vector<128x128xf32>
    %5 = tpu.matmul %3, %4, %cst_5 {dimension_numbers = #tpu.dot_dimension_numbers<[1], [0], [0], [1], [0, 0, 1, 1], [], []>} : vector<128x128xbf16>, vector<128x128xbf16>, vector<128x128xf32> -> vector<128x128xf32>
    %c0_6 = arith.constant 0 : index
    %c0_7 = arith.constant 0 : index
    %6 = vector.load %arg4[%c0_6, %c0_7] : memref<1x128xf32, #tpu.memory_space<vmem>>, vector<1x128xf32>
    %7 = vector.broadcast %6 : vector<1x128xf32> to vector<128x128xf32>
    %8 = arith.addf %5, %7 : vector<128x128xf32>
    %cst_8 = arith.constant 0.000000e+00 : f32
    %9 = vector.broadcast %cst_8 : f32 to vector<128x128xf32>
    %10 = arith.maximumf %8, %9 : vector<128x128xf32>
    %11 = arith.truncf %10 : vector<128x128xf32> to vector<128x128xbf16>
    %c0_9 = arith.constant 0 : index
    %c0_10 = arith.constant 0 : index
    %12 = vector.load %arg5[%c0_9, %c0_10] : memref<128x128xbf16, #tpu.memory_space<vmem>>, vector<128x128xbf16>
    %cst_11 = arith.constant dense<0.000000e+00> : vector<128x128xf32>
    %13 = tpu.matmul %11, %12, %cst_11 {dimension_numbers = #tpu.dot_dimension_numbers<[1], [0], [0], [1], [0, 0, 1, 1], [], []>} : vector<128x128xbf16>, vector<128x128xbf16>, vector<128x128xf32> -> vector<128x128xf32>
    %c0_12 = arith.constant 0 : index
    %c0_13 = arith.constant 0 : index
    %14 = vector.load %arg1[%c0_12, %c0_13] : memref<128x128xbf16, #tpu.memory_space<vmem>>, vector<128x128xbf16>
    %15 = arith.truncf %13 : vector<128x128xf32> to vector<128x128xbf16>
    %cst_14 = arith.constant dense<0.000000e+00> : vector<128x128xf32>
    %16 = tpu.matmul %14, %15, %cst_14 {dimension_numbers = #tpu.dot_dimension_numbers<[1], [0], [0], [1], [0, 0, 1, 1], [], []>} : vector<128x128xbf16>, vector<128x128xbf16>, vector<128x128xf32> -> vector<128x128xf32>
    %c0_15 = arith.constant 0 : index
    %c0_16 = arith.constant 0 : index
    %17 = vector.load %arg6[%c0_15, %c0_16] : memref<1x128xf32, #tpu.memory_space<vmem>>, vector<1x128xf32>
    %18 = vector.broadcast %17 : vector<1x128xf32> to vector<128x128xf32>
    %19 = arith.addf %16, %18 : vector<128x128xf32>
    %c0_17 = arith.constant 0 : index
    %c0_18 = arith.constant 0 : index
    %20 = vector.load %arg7[%c0_17, %c0_18] : memref<128x128xf32, #tpu.memory_space<vmem>>, vector<128x128xf32>
    tpu.vector_store %arg7[%c0_17, %c0_18], %19 {strides = array<i32>} : memref<128x128xf32, #tpu.memory_space<vmem>>, vector<128x128xf32>,
    return
  }
  func.func @transform_0(%arg0: i32) -> (i32, i32) {
    %c0_i32 = arith.constant 0 : i32
    %c0_i32_0 = arith.constant 0 : i32
    %c0_i32_1 = arith.constant 0 : i32
    return %c0_i32, %c0_i32_0 : i32, i32
  }
  func.func @transform_1(%arg0: i32) -> (i32, i32) {
    %c0_i32 = arith.constant 0 : i32
    %c0_i32_0 = arith.constant 0 : i32
    %c0_i32_1 = arith.constant 0 : i32
    return %c0_i32, %c0_i32_0 : i32, i32
  }
  func.func @transform_2(%arg0: i32) -> (i32, i32) {
    %c0_i32 = arith.constant 0 : i32
    %c0_i32_0 = arith.constant 0 : i32
    %c0_i32_1 = arith.constant 0 : i32
    return %c0_i32, %c0_i32_0 : i32, i32
  }
  func.func @transform_3(%arg0: i32) -> (i32, i32) {
    %c0_i32 = arith.constant 0 : i32
    %c0_i32_0 = arith.constant 0 : i32
    %c0_i32_1 = arith.constant 0 : i32
    return %c0_i32, %c0_i32_0 : i32, i32
  }
  func.func @transform_4(%arg0: i32) -> (i32, i32) {
    %c0_i32 = arith.constant 0 : i32
    %c0_i32_0 = arith.constant 0 : i32
    %c0_i32_1 = arith.constant 0 : i32
    return %c0_i32, %c0_i32_0 : i32, i32
  }
  func.func @transform_5(%arg0: i32) -> (i32, i32) {
    %c0_i32 = arith.constant 0 : i32
    %c0_i32_0 = arith.constant 0 : i32
    %c0_i32_1 = arith.constant 0 : i32
    return %c0_i32, %c0_i32_0 : i32, i32
  }
  func.func @transform_6(%arg0: i32) -> (i32, i32) {
    %c0_i32 = arith.constant 0 : i32
    %c0_i32_0 = arith.constant 0 : i32
    %c0_i32_1 = arith.constant 0 : i32
    return %c0_i32, %c0_i32_0 : i32, i32
  }
}

</mosaic_0001>

<llo_original>
// kernel: tpu_custom_call.1
$region0: #{tpu_custom_call.1}
  #allocation0 [shape = 'u32[]', space=smem, size = 0x4, offset = 0x4, fixed_abs, tag = 'smem constant byte address 0x4 - core index']
  #allocation1 [shape = 'u32[72,128]{1,0:T(1,128)}', space=vmem, size = 0x9000, scoped, tag = 'internal scratch']
  %s0 = inlined_call_operand.hbm [shape: bf16[128,128], index: 0, kind: input, shape index: {}]
  %s1 = inlined_call_operand.hbm [shape: bf16[128,128], index: 1, kind: input, shape index: {}]
  %s2 = inlined_call_operand.hbm [shape: bf16[128,128], index: 2, kind: input, shape index: {}]
  %s3 = inlined_call_operand.vmem [shape: f32[1,128], index: 3, kind: input, shape index: {}]
  %s4 = inlined_call_operand.hbm [shape: bf16[128,128], index: 4, kind: input, shape index: {}]
  %s5 = inlined_call_operand.vmem [shape: f32[1,128], index: 5, kind: input, shape index: {}]
  %s6 = inlined_call_operand.hbm [shape: f32[128,128], index: 6, kind: output, shape index: {}]
  %s7 = sld [smem:[#allocation0]]
  $region50: #{tpu_custom_call.1} parent=0
    _
  %s9 = ssub.s32 1, %s7
  %s10 = scalar_select 0, %s9, %s7
  $region1: #{tpu_custom_call.1} parent=0
    #allocation2 [shape = 'u8[32768]{0}', space=vmem, size = 0x8000, scoped, tag = 'input window, operand 0, single buffered']
    #allocation3 [shape = 's32[1]{0}', space=sflag, size = 0x4, scoped, tag = 'scoped memory for tpu_custom_call.1']
    #allocation4 [shape = 's32[1]{0}', space=sflag, size = 0x4, scoped, tag = 'scoped memory for tpu_custom_call.1']
    #allocation5 [shape = 'u8[32768]{0}', space=vmem, size = 0x8000, scoped, tag = 'input window, operand 1, single buffered']
    #allocation6 [shape = 's32[1]{0}', space=sflag, size = 0x4, scoped, tag = 'scoped memory for tpu_custom_call.1']
    #allocation7 [shape = 'u8[32768]{0}', space=vmem, size = 0x8000, scoped, tag = 'input window, operand 2, single buffered']
    #allocation8 [shape = 'u8[32768]{0}', space=vmem, size = 0x8000, scoped, tag = 'input window, operand 4, single buffered']
    #allocation9 [shape = 's32[1]{0}', space=sflag, size = 0x4, scoped, tag = 'scoped memory for tpu_custom_call.1']
    #allocation10 [shape = 'u8[65536]{0}', space=vmem, size = 0x10000, scoped, tag = 'output window, operand 0, single buffered']
    %11 = vsyncpa [#allocation3], 0
    %12 = vsyncpa [#allocation6], 0
    %13 = vsyncpa [#allocation9], 0
    %14 = vsyncpa [#allocation4], 0
    // Predicated region
    $region2: #{tpu_custom_call.1} parent=1 // pred_check
      _
    $region3: #{tpu_custom_call.1} parent=1 // pred_check_branch
      %16 = sbr.rel (0) target = $region5
    $region4: #{tpu_custom_call.1} parent=1 // pred_region
      %18 = vsyncadd [#allocation3], 0
      %s19 = sshll.u32 %s0, 4
      %s20 = int_to_ptr.hbm [resolvable:$true] %s19
      %s21 = sshll.u32 [#allocation2], 4
      %s22 = int_to_ptr.vmem [resolvable:$true] %s21
      %27 = dma.hbm_to_vmem [thread:$0]  %s20, 1024, %s22, [#allocation3], 64, 64, 4
    $region5: #{tpu_custom_call.1} parent=1 // pred_fallthru
      _
    // Predicated region
    $region6: #{tpu_custom_call.1} parent=1 // pred_check
      _
    $region7: #{tpu_custom_call.1} parent=1 // pred_check_branch
      %29 = sbr.rel (0) target = $region9
    $region8: #{tpu_custom_call.1} parent=1 // pred_region
      %31 = vsyncadd [#allocation6], 0
      %s32 = sshll.u32 %s1, 4
      %s33 = int_to_ptr.hbm [resolvable:$true] %s32
      %s34 = sshll.u32 [#allocation5], 4
      %s35 = int_to_ptr.vmem [resolvable:$true] %s34
      %40 = dma.hbm_to_vmem [thread:$0]  %s33, 1024, %s35, [#allocation6], 64, 64, 4
    $region9: #{tpu_custom_call.1} parent=1 // pred_fallthru
      _
    // Predicated region
    $region10: #{tpu_custom_call.1} parent=1 // pred_check
      _
    $region11: #{tpu_custom_call.1} parent=1 // pred_check_branch
      %42 = sbr.rel (0) target = $region13
    $region12: #{tpu_custom_call.1} parent=1 // pred_region
      %44 = vsyncadd [#allocation6], 0
      %s45 = sshll.u32 %s2, 4
      %s46 = int_to_ptr.hbm [resolvable:$true] %s45
      %s47 = sshll.u32 [#allocation7], 4
      %s48 = int_to_ptr.vmem [resolvable:$true] %s47
      %53 = dma.hbm_to_vmem [thread:$0]  %s46, 1024, %s48, [#allocation6], 64, 64, 4
    $region13: #{tpu_custom_call.1} parent=1 // pred_fallthru
      _
    // Predicated region
    $region14: #{tpu_custom_call.1} parent=1 // pred_check
      _
    $region15: #{tpu_custom_call.1} parent=1 // pred_check_branch
      %55 = sbr.rel (0) target = $region17
    $region16: #{tpu_custom_call.1} parent=1 // pred_region
      _
    $region17: #{tpu_custom_call.1} parent=1 // pred_fallthru
      _
    // Predicated region
    $region18: #{tpu_custom_call.1} parent=1 // pred_check
      _
    $region19: #{tpu_custom_call.1} parent=1 // pred_check_branch
      %57 = sbr.rel (0) target = $region21
    $region20: #{tpu_custom_call.1} parent=1 // pred_region
      %59 = vsyncadd [#allocation9], 0
      %s60 = sshll.u32 %s4, 4
      %s61 = int_to_ptr.hbm [resolvable:$true] %s60
      %s62 = sshll.u32 [#allocation8], 4
      %s63 = int_to_ptr.vmem [resolvable:$true] %s62
      %68 = dma.hbm_to_vmem [thread:$0]  %s61, 1024, %s63, [#allocation9], 64, 64, 4
    $region21: #{tpu_custom_call.1} parent=1 // pred_fallthru
      _
    // Predicated region
    $region22: #{tpu_custom_call.1} parent=1 // pred_check
      _
    $region23: #{tpu_custom_call.1} parent=1 // pred_check_branch
      %70 = sbr.rel (0) target = $region25
    $region24: #{tpu_custom_call.1} parent=1 // pred_region
      _
    $region25: #{tpu_custom_call.1} parent=1 // pred_fallthru
      _
    // Predicated region
    $region26: #{tpu_custom_call.1} parent=1 // pred_check
      _
    $region27: #{tpu_custom_call.1} parent=1 // pred_check_branch
      %72 = sbr.rel (0) target = $region29
    $region28: #{tpu_custom_call.1} parent=1 // pred_region
      %74 = dma.done [#allocation3], 1024
    $region29: #{tpu_custom_call.1} parent=1 // pred_fallthru
      _
    // Predicated region
    $region30: #{tpu_custom_call.1} parent=1 // pred_check
      _
    $region31: #{tpu_custom_call.1} parent=1 // pred_check_branch
      %76 = sbr.rel (0) target = $region33
    $region32: #{tpu_custom_call.1} parent=1 // pred_region
      %78 = dma.done [#allocation6], 1024
    $region33: #{tpu_custom_call.1} parent=1 // pred_fallthru
      _
    // Predicated region
    $region34: #{tpu_custom_call.1} parent=1 // pred_check
      _
    $region35: #{tpu_custom_call.1} parent=1 // pred_check_branch
      %80 = sbr.rel (0) target = $region37
    $region36: #{tpu_custom_call.1} parent=1 // pred_region
      %82 = dma.done [#allocation6], 1024
    $region37: #{tpu_custom_call.1} parent=1 // pred_fallthru
      _
    // Predicated region
    $region38: #{tpu_custom_call.1} parent=1 // pred_check
      _
    $region39: #{tpu_custom_call.1} parent=1 // pred_check_branch
      %84 = sbr.rel (0) target = $region41
    $region40: #{tpu_custom_call.1} parent=1 // pred_region
      %86 = dma.done [#allocation9], 1024
    $region41: #{tpu_custom_call.1} parent=1 // pred_fallthru
      _
    %v87 = vld [vmem:[#allocation5] sm:$0xf]
    %v88 = vld [vmem:[#allocation5 + $0x4] sm:$0xf]
    %v89 = vld [vmem:[#allocation5 + $0x8] sm:$0xf]
    %v90 = vld [vmem:[#allocation5 + $0xc] sm:$0xf]
    %v91 = vld [vmem:[#allocation5 + $0x10] sm:$0xf]
    %v92 = vld [vmem:[#allocation5 + $0x14] sm:$0xf]
    %v93 = vld [vmem:[#allocation5 + $0x18] sm:$0xf]
    %v94 = vld [vmem:[#allocation5 + $0x1c] sm:$0xf]
    %v95 = vld [vmem:[#allocation5 + $0x20] sm:$0xf]
    %v96 = vld [vmem:[#allocation5 + $0x24] sm:$0xf]
    %v97 = vld [vmem:[#allocation5 + $0x28] sm:$0xf]
    %v98 = vld [vmem:[#allocation5 + $0x2c] sm:$0xf]
    %v99 = vld [vmem:[#allocation5 + $0x30] sm:$0xf]
    %v100 = vld [vmem:[#allocation5 + $0x34] sm:$0xf]
    %v101 = vld [vmem:[#allocation5 + $0x38] sm:$0xf]
    %v102 = vld [vmem:[#allocation5 + $0x3c] sm:$0xf]
    %v103 = vld [vmem:[#allocation7] sm:$0xf]
    %v104 = vld [vmem:[#allocation7 + $0x4] sm:$0xf]
    %v105 = vld [vmem:[#allocation7 + $0x8] sm:$0xf]
    %v106 = vld [vmem:[#allocation7 + $0xc] sm:$0xf]
    %v107 = vld [vmem:[#allocation7 + $0x10] sm:$0xf]
    %v108 = vld [vmem:[#allocation7 + $0x14] sm:$0xf]
    %v109 = vld [vmem:[#allocation7 + $0x18] sm:$0xf]
    %v110 = vld [vmem:[#allocation7 + $0x1c] sm:$0xf]
    %v111 = vld [vmem:[#allocation7 + $0x20] sm:$0xf]
    %v112 = vld [vmem:[#allocation7 + $0x24] sm:$0xf]
    %v113 = vld [vmem:[#allocation7 + $0x28] sm:$0xf]
    %v114 = vld [vmem:[#allocation7 + $0x2c] sm:$0xf]
    %v115 = vld [vmem:[#allocation7 + $0x30] sm:$0xf]
    %v116 = vld [vmem:[#allocation7 + $0x34] sm:$0xf]
    %v117 = vld [vmem:[#allocation7 + $0x38] sm:$0xf]
    %v118 = vld [vmem:[#allocation7 + $0x3c] sm:$0xf]
    %v135 = vunpack.c.l.b16 %v87
    %v136 = vunpack.c.l.b16 %v88
    %v137 = vunpack.c.l.b16 %v89
    %v138 = vunpack.c.l.b16 %v90
    %v139 = vunpack.c.l.b16 %v91
    %v140 = vunpack.c.l.b16 %v92
    %v141 = vunpack.c.l.b16 %v93
    %v142 = vunpack.c.l.b16 %v94
    %v143 = vunpack.c.l.b16 %v95
    %v144 = vunpack.c.l.b16 %v96
    %v145 = vunpack.c.l.b16 %v97
    %v146 = vunpack.c.l.b16 %v98
    %v147 = vunpack.c.l.b16 %v99
    %v148 = vunpack.c.l.b16 %v100
    %v149 = vunpack.c.l.b16 %v101
    %v150 = vunpack.c.l.b16 %v102
    %v151 = vpack.c.b16 %v136, %v135
    %v152 = vpack.c.b16 %v138, %v137
    %v153 = vpack.c.b16 %v140, %v139
    %v154 = vpack.c.b16 %v142, %v141
    %v155 = vpack.c.b16 %v144, %v143
    %v156 = vpack.c.b16 %v146, %v145
    %v157 = vpack.c.b16 %v148, %v147
    %v158 = vpack.c.b16 %v150, %v149
    %v183 = vunpack.c.l.b16 %v103
    %v184 = vunpack.c.l.b16 %v104
    %v185 = vunpack.c.l.b16 %v105
    %v186 = vunpack.c.l.b16 %v106
    %v187 = vunpack.c.l.b16 %v107
    %v188 = vunpack.c.l.b16 %v108
    %v189 = vunpack.c.l.b16 %v109
    %v190 = vunpack.c.l.b16 %v110
    %v191 = vunpack.c.l.b16 %v111
    %v192 = vunpack.c.l.b16 %v112
    %v193 = vunpack.c.l.b16 %v113
    %v194 = vunpack.c.l.b16 %v114
    %v195 = vunpack.c.l.b16 %v115
    %v196 = vunpack.c.l.b16 %v116
    %v197 = vunpack.c.l.b16 %v117
    %v198 = vunpack.c.l.b16 %v118
    %v199 = vpack.c.b16 %v184, %v183
    %v200 = vpack.c.b16 %v186, %v185
    %v201 = vpack.c.b16 %v188, %v187
    %v202 = vpack.c.b16 %v190, %v189
    %v203 = vpack.c.b16 %v192, %v191
    %v204 = vpack.c.b16 %v194, %v193
    %v205 = vpack.c.b16 %v196, %v195
    %v206 = vpack.c.b16 %v198, %v197
    %215 = vmatpush.bf16.msra.mxu0 %v206
    %216 = vmatpush.bf16.msra.mxu0 %v205
    %217 = vmatpush.bf16.msra.mxu0 %v204
    %218 = vmatpush.bf16.msra.mxu0 %v203
    %219 = vmatpush.bf16.msra.mxu0 %v202
    %220 = vmatpush.bf16.msra.mxu0 %v201
    %221 = vmatpush.bf16.msra.mxu0 %v200
    %222 = vmatpush.bf16.msra.mxu0 %v199
    %223 = vmatmul.bf16.gmra.mxu0 %v151
    %v224 = vpop.f32.mrf.mxu0
    %v225 = vadd.f32 0.0, %v224
    %v226 = vpop.f32.mrf.mxu0
    %v227 = vadd.f32 0.0, %v226
    %228 = vmatmul.bf16.gmra.mxu0 %v152
    %v229 = vpop.f32.mrf.mxu0
    %v230 = vadd.f32 0.0, %v229
    %v231 = vpop.f32.mrf.mxu0
    %v232 = vadd.f32 0.0, %v231
    %233 = vmatmul.bf16.gmra.mxu0 %v153
    %v234 = vpop.f32.mrf.mxu0
    %v235 = vadd.f32 0.0, %v234
    %v236 = vpop.f32.mrf.mxu0
    %v237 = vadd.f32 0.0, %v236
    %238 = vmatmul.bf16.gmra.mxu0 %v154
    %v239 = vpop.f32.mrf.mxu0
    %v240 = vadd.f32 0.0, %v239
    %v241 = vpop.f32.mrf.mxu0
    %v242 = vadd.f32 0.0, %v241
    %243 = vmatmul.bf16.gmra.mxu0 %v155
    %v244 = vpop.f32.mrf.mxu0
    %v245 = vadd.f32 0.0, %v244
    %v246 = vpop.f32.mrf.mxu0
    %v247 = vadd.f32 0.0, %v246
    %248 = vmatmul.bf16.gmra.mxu0 %v156
    %v249 = vpop.f32.mrf.mxu0
    %v250 = vadd.f32 0.0, %v249
    %v251 = vpop.f32.mrf.mxu0
    %v252 = vadd.f32 0.0, %v251
    %253 = vmatmul.bf16.gmra.mxu0 %v157
    %v254 = vpop.f32.mrf.mxu0
    %v255 = vadd.f32 0.0, %v254
    %v256 = vpop.f32.mrf.mxu0
    %v257 = vadd.f32 0.0, %v256
    %258 = vmatmul.bf16.gmra.mxu0 %v158
    %v259 = vpop.f32.mrf.mxu0
    %v260 = vadd.f32 0.0, %v259
    %v261 = vpop.f32.mrf.mxu0
    %v262 = vadd.f32 0.0, %v261
    %263 = vdwg.mxu0
    %v264 = vld [vmem:[#allocation2] sm:$0xf]
    %v265 = vld [vmem:[#allocation2 + $0x4] sm:$0xf]
    %v266 = vld [vmem:[#allocation2 + $0x8] sm:$0xf]
    %v267 = vld [vmem:[#allocation2 + $0xc] sm:$0xf]
    %v268 = vld [vmem:[#allocation2 + $0x10] sm:$0xf]
    %v269 = vld [vmem:[#allocation2 + $0x14] sm:$0xf]
    %v270 = vld [vmem:[#allocation2 + $0x18] sm:$0xf]
    %v271 = vld [vmem:[#allocation2 + $0x1c] sm:$0xf]
    %v272 = vld [vmem:[#allocation2 + $0x20] sm:$0xf]
    %v273 = vld [vmem:[#allocation2 + $0x24] sm:$0xf]
    %v274 = vld [vmem:[#allocation2 + $0x28] sm:$0xf]
    %v275 = vld [vmem:[#allocation2 + $0x2c] sm:$0xf]
    %v276 = vld [vmem:[#allocation2 + $0x30] sm:$0xf]
    %v277 = vld [vmem:[#allocation2 + $0x34] sm:$0xf]
    %v278 = vld [vmem:[#allocation2 + $0x38] sm:$0xf]
    %v279 = vld [vmem:[#allocation2 + $0x3c] sm:$0xf]
    %v280 = vpack.c.bf16 %v227, %v225
    %v281 = vpack.c.bf16 %v232, %v230
    %v282 = vpack.c.bf16 %v237, %v235
    %v283 = vpack.c.bf16 %v242, %v240
    %v284 = vpack.c.bf16 %v247, %v245
    %v285 = vpack.c.bf16 %v252, %v250
    %v286 = vpack.c.bf16 %v257, %v255
    %v287 = vpack.c.bf16 %v262, %v260
    %v288 = vld [vmem:[%s3] sm:$0x1]
    %v290 = vperm.slane %v288, 0
    %v308 = vunpack.c.l.b16 %v264
    %v309 = vunpack.c.l.b16 %v265
    %v310 = vunpack.c.l.b16 %v266
    %v311 = vunpack.c.l.b16 %v267
    %v312 = vunpack.c.l.b16 %v268
    %v313 = vunpack.c.l.b16 %v269
    %v314 = vunpack.c.l.b16 %v270
    %v315 = vunpack.c.l.b16 %v271
    %v316 = vunpack.c.l.b16 %v272
    %v317 = vunpack.c.l.b16 %v273
    %v318 = vunpack.c.l.b16 %v274
    %v319 = vunpack.c.l.b16 %v275
    %v320 = vunpack.c.l.b16 %v276
    %v321 = vunpack.c.l.b16 %v277
    %v322 = vunpack.c.l.b16 %v278
    %v323 = vunpack.c.l.b16 %v279
    %v324 = vpack.c.b16 %v309, %v308
    %v325 = vpack.c.b16 %v311, %v310
    %v326 = vpack.c.b16 %v313, %v312
    %v327 = vpack.c.b16 %v315, %v314
    %v328 = vpack.c.b16 %v317, %v316
    %v329 = vpack.c.b16 %v319, %v318
    %v330 = vpack.c.b16 %v321, %v320
    %v331 = vpack.c.b16 %v323, %v322
    %340 = vmatpush.bf16.msra.mxu0 %v287
    %341 = vmatpush.bf16.msra.mxu0 %v286
    %342 = vmatpush.bf16.msra.mxu0 %v285
    %343 = vmatpush.bf16.msra.mxu0 %v284
    %344 = vmatpush.bf16.msra.mxu0 %v283
    %345 = vmatpush.bf16.msra.mxu0 %v282
    %346 = vmatpush.bf16.msra.mxu0 %v281
    %347 = vmatpush.bf16.msra.mxu0 %v280
    %348 = vmatmul.bf16.gmra.mxu0 %v324
    %v349 = vpop.f32.mrf.mxu0
    %v350 = vadd.f32 %v290, %v349
    %v351 = vpop.f32.mrf.mxu0
    %v352 = vadd.f32 %v290, %v351
    %353 = vmatmul.bf16.gmra.mxu0 %v325
    %v354 = vpop.f32.mrf.mxu0
    %v355 = vadd.f32 %v290, %v354
    %v356 = vpop.f32.mrf.mxu0
    %v357 = vadd.f32 %v290, %v356
    %358 = vmatmul.bf16.gmra.mxu0 %v326
    %v359 = vpop.f32.mrf.mxu0
    %v360 = vadd.f32 %v290, %v359
    %v361 = vpop.f32.mrf.mxu0
    %v362 = vadd.f32 %v290, %v361
    %363 = vmatmul.bf16.gmra.mxu0 %v327
    %v364 = vpop.f32.mrf.mxu0
    %v365 = vadd.f32 %v290, %v364
    %v366 = vpop.f32.mrf.mxu0
    %v367 = vadd.f32 %v290, %v366
    %368 = vmatmul.bf16.gmra.mxu0 %v328
    %v369 = vpop.f32.mrf.mxu0
    %v370 = vadd.f32 %v290, %v369
    %v371 = vpop.f32.mrf.mxu0
    %v372 = vadd.f32 %v290, %v371
    %373 = vmatmul.bf16.gmra.mxu0 %v329
    %v374 = vpop.f32.mrf.mxu0
    %v375 = vadd.f32 %v290, %v374
    %v376 = vpop.f32.mrf.mxu0
    %v377 = vadd.f32 %v290, %v376
    %378 = vmatmul.bf16.gmra.mxu0 %v330
    %v379 = vpop.f32.mrf.mxu0
    %v380 = vadd.f32 %v290, %v379
    %v381 = vpop.f32.mrf.mxu0
    %v382 = vadd.f32 %v290, %v381
    %383 = vmatmul.bf16.gmra.mxu0 %v331
    %v384 = vpop.f32.mrf.mxu0
    %v385 = vadd.f32 %v290, %v384
    %v386 = vpop.f32.mrf.mxu0
    %v387 = vadd.f32 %v290, %v386
    %388 = vdwg.mxu0
    %v389 = vmax.f32 %v350, 0.0
    %v390 = vmax.f32 %v352, 0.0
    %v391 = vmax.f32 %v355, 0.0
    %v392 = vmax.f32 %v357, 0.0
    %v393 = vmax.f32 %v360, 0.0
    %v394 = vmax.f32 %v362, 0.0
    %v395 = vmax.f32 %v365, 0.0
    %v396 = vmax.f32 %v367, 0.0
    %v397 = vmax.f32 %v370, 0.0
    %v398 = vmax.f32 %v372, 0.0
    %v399 = vmax.f32 %v375, 0.0
    %v400 = vmax.f32 %v377, 0.0
    %v401 = vmax.f32 %v380, 0.0
    %v402 = vmax.f32 %v382, 0.0
    %v403 = vmax.f32 %v385, 0.0
    %v404 = vmax.f32 %v387, 0.0
    %v405 = vpack.c.bf16 %v390, %v389
    %v406 = vpack.c.bf16 %v392, %v391
    %v407 = vpack.c.bf16 %v394, %v393
    %v408 = vpack.c.bf16 %v396, %v395
    %v409 = vpack.c.bf16 %v398, %v397
    %v410 = vpack.c.bf16 %v400, %v399
    %v411 = vpack.c.bf16 %v402, %v401
    %v412 = vpack.c.bf16 %v404, %v403
    %v413 = vld [vmem:[#allocation8] sm:$0xf]
    %v414 = vld [vmem:[#allocation8 + $0x4] sm:$0xf]
    %v415 = vld [vmem:[#allocation8 + $0x8] sm:$0xf]
    %v416 = vld [vmem:[#allocation8 + $0xc] sm:$0xf]
    %v417 = vld [vmem:[#allocation8 + $0x10] sm:$0xf]
    %v418 = vld [vmem:[#allocation8 + $0x14] sm:$0xf]
    %v419 = vld [vmem:[#allocation8 + $0x18] sm:$0xf]
    %v420 = vld [vmem:[#allocation8 + $0x1c] sm:$0xf]
    %v421 = vld [vmem:[#allocation8 + $0x20] sm:$0xf]
    %v422 = vld [vmem:[#allocation8 + $0x24] sm:$0xf]
    %v423 = vld [vmem:[#allocation8 + $0x28] sm:$0xf]
    %v424 = vld [vmem:[#allocation8 + $0x2c] sm:$0xf]
    %v425 = vld [vmem:[#allocation8 + $0x30] sm:$0xf]
    %v426 = vld [vmem:[#allocation8 + $0x34] sm:$0xf]
    %v427 = vld [vmem:[#allocation8 + $0x38] sm:$0xf]
    %v428 = vld [vmem:[#allocation8 + $0x3c] sm:$0xf]
    %v445 = vunpack.c.l.b16 %v413
    %v446 = vunpack.c.l.b16 %v414
    %v447 = vunpack.c.l.b16 %v415
    %v448 = vunpack.c.l.b16 %v416
    %v449 = vunpack.c.l.b16 %v417
    %v450 = vunpack.c.l.b16 %v418
    %v451 = vunpack.c.l.b16 %v419
    %v452 = vunpack.c.l.b16 %v420
    %v453 = vunpack.c.l.b16 %v421
    %v454 = vunpack.c.l.b16 %v422
    %v455 = vunpack.c.l.b16 %v423
    %v456 = vunpack.c.l.b16 %v424
    %v457 = vunpack.c.l.b16 %v425
    %v458 = vunpack.c.l.b16 %v426
    %v459 = vunpack.c.l.b16 %v427
    %v460 = vunpack.c.l.b16 %v428
    %v461 = vpack.c.b16 %v446, %v445
    %v462 = vpack.c.b16 %v448, %v447
    %v463 = vpack.c.b16 %v450, %v449
    %v464 = vpack.c.b16 %v452, %v451
    %v465 = vpack.c.b16 %v454, %v453
    %v466 = vpack.c.b16 %v456, %v455
    %v467 = vpack.c.b16 %v458, %v457
    %v468 = vpack.c.b16 %v460, %v459
    %477 = vmatpush.bf16.msra.mxu0 %v468
    %478 = vmatpush.bf16.msra.mxu0 %v467
    %479 = vmatpush.bf16.msra.mxu0 %v466
    %480 = vmatpush.bf16.msra.mxu0 %v465
    %481 = vmatpush.bf16.msra.mxu0 %v464
    %482 = vmatpush.bf16.msra.mxu0 %v463
    %483 = vmatpush.bf16.msra.mxu0 %v462
    %484 = vmatpush.bf16.msra.mxu0 %v461
    %485 = vmatmul.bf16.gmra.mxu0 %v405
    %v486 = vpop.f32.mrf.mxu0
    %v487 = vadd.f32 0.0, %v486
    %v488 = vpop.f32.mrf.mxu0
    %v489 = vadd.f32 0.0, %v488
    %490 = vmatmul.bf16.gmra.mxu0 %v406
    %v491 = vpop.f32.mrf.mxu0
    %v492 = vadd.f32 0.0, %v491
    %v493 = vpop.f32.mrf.mxu0
    %v494 = vadd.f32 0.0, %v493
    %495 = vmatmul.bf16.gmra.mxu0 %v407
    %v496 = vpop.f32.mrf.mxu0
    %v497 = vadd.f32 0.0, %v496
    %v498 = vpop.f32.mrf.mxu0
    %v499 = vadd.f32 0.0, %v498
    %500 = vmatmul.bf16.gmra.mxu0 %v408
    %v501 = vpop.f32.mrf.mxu0
    %v502 = vadd.f32 0.0, %v501
    %v503 = vpop.f32.mrf.mxu0
    %v504 = vadd.f32 0.0, %v503
    %505 = vmatmul.bf16.gmra.mxu0 %v409
    %v506 = vpop.f32.mrf.mxu0
    %v507 = vadd.f32 0.0, %v506
    %v508 = vpop.f32.mrf.mxu0
    %v509 = vadd.f32 0.0, %v508
    %510 = vmatmul.bf16.gmra.mxu0 %v410
    %v511 = vpop.f32.mrf.mxu0
    %v512 = vadd.f32 0.0, %v511
    %v513 = vpop.f32.mrf.mxu0
    %v514 = vadd.f32 0.0, %v513
    %515 = vmatmul.bf16.gmra.mxu0 %v411
    %v516 = vpop.f32.mrf.mxu0
    %v517 = vadd.f32 0.0, %v516
    %v518 = vpop.f32.mrf.mxu0
    %v519 = vadd.f32 0.0, %v518
    %520 = vmatmul.bf16.gmra.mxu0 %v412
    %v521 = vpop.f32.mrf.mxu0
    %v522 = vadd.f32 0.0, %v521
    %v523 = vpop.f32.mrf.mxu0
    %v524 = vadd.f32 0.0, %v523
    %525 = vdwg.mxu0
    %v526 = vpack.c.bf16 %v489, %v487
    %v527 = vpack.c.bf16 %v494, %v492
    %v528 = vpack.c.bf16 %v499, %v497
    %v529 = vpack.c.bf16 %v504, %v502
    %v530 = vpack.c.bf16 %v509, %v507
    %v531 = vpack.c.bf16 %v514, %v512
    %v532 = vpack.c.bf16 %v519, %v517
    %v533 = vpack.c.bf16 %v524, %v522
    %v534 = vld [vmem:[%s5] sm:$0x1]
    %v536 = vperm.slane %v534, 0
    %538 = vmatpush.bf16.msra.mxu0 %v533
    %539 = vmatpush.bf16.msra.mxu0 %v532
    %540 = vmatpush.bf16.msra.mxu0 %v531
    %541 = vmatpush.bf16.msra.mxu0 %v530
    %542 = vmatpush.bf16.msra.mxu0 %v529
    %543 = vmatpush.bf16.msra.mxu0 %v528
    %544 = vmatpush.bf16.msra.mxu0 %v527
    %545 = vmatpush.bf16.msra.mxu0 %v526
    %546 = vmatmul.bf16.gmra.mxu0 %v324
    %v547 = vpop.f32.mrf.mxu0
    %v548 = vadd.f32 %v536, %v547
    %v549 = vpop.f32.mrf.mxu0
    %v550 = vadd.f32 %v536, %v549
    %551 = vmatmul.bf16.gmra.mxu0 %v325
    %v552 = vpop.f32.mrf.mxu0
    %v553 = vadd.f32 %v536, %v552
    %v554 = vpop.f32.mrf.mxu0
    %v555 = vadd.f32 %v536, %v554
    %556 = vmatmul.bf16.gmra.mxu0 %v326
    %v557 = vpop.f32.mrf.mxu0
    %v558 = vadd.f32 %v536, %v557
    %v559 = vpop.f32.mrf.mxu0
    %v560 = vadd.f32 %v536, %v559
    %561 = vmatmul.bf16.gmra.mxu0 %v327
    %v562 = vpop.f32.mrf.mxu0
    %v563 = vadd.f32 %v536, %v562
    %v564 = vpop.f32.mrf.mxu0
    %v565 = vadd.f32 %v536, %v564
    %566 = vmatmul.bf16.gmra.mxu0 %v328
    %v567 = vpop.f32.mrf.mxu0
    %v568 = vadd.f32 %v536, %v567
    %v569 = vpop.f32.mrf.mxu0
    %v570 = vadd.f32 %v536, %v569
    %571 = vmatmul.bf16.gmra.mxu0 %v329
    %v572 = vpop.f32.mrf.mxu0
    %v573 = vadd.f32 %v536, %v572
    %v574 = vpop.f32.mrf.mxu0
    %v575 = vadd.f32 %v536, %v574
    %576 = vmatmul.bf16.gmra.mxu0 %v330
    %v577 = vpop.f32.mrf.mxu0
    %v578 = vadd.f32 %v536, %v577
    %v579 = vpop.f32.mrf.mxu0
    %v580 = vadd.f32 %v536, %v579
    %581 = vmatmul.bf16.gmra.mxu0 %v331
    %v582 = vpop.f32.mrf.mxu0
    %v583 = vadd.f32 %v536, %v582
    %v584 = vpop.f32.mrf.mxu0
    %v585 = vadd.f32 %v536, %v584
    %586 = vdwg.mxu0
    %587 = vst [vmem:[#allocation10] sm:$0xff] %v548
    %588 = vst [vmem:[#allocation10 + $0x8] sm:$0xff] %v550
    %589 = vst [vmem:[#allocation10 + $0x10] sm:$0xff] %v553
    %590 = vst [vmem:[#allocation10 + $0x18] sm:$0xff] %v555
    %591 = vst [vmem:[#allocation10 + $0x20] sm:$0xff] %v558
    %592 = vst [vmem:[#allocation10 + $0x28] sm:$0xff] %v560
    %593 = vst [vmem:[#allocation10 + $0x30] sm:$0xff] %v563
    %594 = vst [vmem:[#allocation10 + $0x38] sm:$0xff] %v565
    %595 = vst [vmem:[#allocation10 + $0x40] sm:$0xff] %v568
    %596 = vst [vmem:[#allocation10 + $0x48] sm:$0xff] %v570
    %597 = vst [vmem:[#allocation10 + $0x50] sm:$0xff] %v573
    %598 = vst [vmem:[#allocation10 + $0x58] sm:$0xff] %v575
    %599 = vst [vmem:[#allocation10 + $0x60] sm:$0xff] %v578
    %600 = vst [vmem:[#allocation10 + $0x68] sm:$0xff] %v580
    %601 = vst [vmem:[#allocation10 + $0x70] sm:$0xff] %v583
    %602 = vst [vmem:[#allocation10 + $0x78] sm:$0xff] %v585
    // Predicated region
    $region42: #{tpu_custom_call.1} parent=1 // pred_check
      _
    $region43: #{tpu_custom_call.1} parent=1 // pred_check_branch
      %604 = sbr.rel (0) target = $region45
    $region44: #{tpu_custom_call.1} parent=1 // pred_region
      %606 = vsyncadd [#allocation4], 0
      %s607 = sshll.u32 [#allocation10], 4
      %s608 = int_to_ptr.vmem [resolvable:$true] %s607
      %s609 = sshll.u32 %s6, 4
      %s610 = int_to_ptr.hbm [resolvable:$true] %s609
      %615 = dma.vmem_to_hbm [thread:$0]  %s608, 2048, %s610, [#allocation4], 128, 128, 8
    $region45: #{tpu_custom_call.1} parent=1 // pred_fallthru
      _
    // Predicated region
    $region46: #{tpu_custom_call.1} parent=1 // pred_check
      _
    $region47: #{tpu_custom_call.1} parent=1 // pred_check_branch
      %617 = sbr.rel (0) target = $region49
    $region48: #{tpu_custom_call.1} parent=1 // pred_region
      %619 = dma.done [#allocation4], 2048
    $region49: #{tpu_custom_call.1} parent=1 // pred_fallthru
      _
    %620 = vsyncpa [#allocation3], 1
    %621 = vsyncpa [#allocation6], 1
    %622 = vsyncpa [#allocation9], 1
    %623 = vsyncpa [#allocation4], 1

</llo_original>
